<compile_context>
chip_gen: v7x
topology: tpu7x:2x2x1
jax: 0.10.0
libtpu: 0.0.40
codegen_flags: <defaults>
</compile_context>

<pallas_src>
import jax
import jax.numpy as jnp
from jax.experimental import pallas as pl
from jax.experimental.pallas import tpu as pltpu

EPS = 1e-5
_VMEM_LIMIT_BYTES = 32 * 1024 * 1024     # explicit scoped-VMEM cap (safe on v5e/v6e/v7x)
_TARGET_BLOCK_BYTES = 2 * 1024 * 1024    # ~2 MiB per (Rt, H*W) tile


def _row_tile(nc, hw, itemsize):
    """Row-tile size: ~2 MiB blocks, multiple of 8 sublanes (or the full extent)."""
    row_bytes = hw * itemsize
    if nc <= 8 or nc * row_bytes <= _TARGET_BLOCK_BYTES:
        return int(nc)
    rt = (_TARGET_BLOCK_BYTES // row_bytes) // 8 * 8
    return int(max(8, min(rt, nc)))


def _stats_kernel(x_ref, sum_ref, sumsq_ref):
    # x_ref: (Rt, HW). Per-row (= per (n, c)) sums over the lane axis.
    x = x_ref[...].astype(jnp.float32)
    sum_ref[...] = jnp.sum(x, axis=1, keepdims=True)
    sumsq_ref[...] = jnp.sum(x * x, axis=1, keepdims=True)


def _norm_relu_kernel(x_ref, scale_ref, shift_ref, o_ref):
    # x_ref: (Rt, HW); scale/shift: (Rt, 1) per-row folded BN affine.
    x = x_ref[...].astype(jnp.float32)
    y = x * scale_ref[...] + shift_ref[...]
    o_ref[...] = jnp.maximum(y, 0.0).astype(o_ref.dtype)


def batchnorm_relu(x_nchw, gamma, beta, eps=EPS):
    """x_nchw: (N, C, H, W). gamma/beta: (C,). Returns (N, C, H, W)."""
    N, C, H, W = x_nchw.shape
    NC, HW = N * C, H * W
    x2d = x_nchw.reshape(NC, HW)               # free view of contiguous NCHW
    rt = _row_tile(NC, HW, x2d.dtype.itemsize)
    grid = (pl.cdiv(NC, rt),)
    cparams = pltpu.CompilerParams(
        dimension_semantics=("parallel",),
        vmem_limit_bytes=_VMEM_LIMIT_BYTES,
    )

    # ---- Pass 1: per-row sum / sum-of-squares (tiled, pipelined) ----
    row_sum, row_sumsq = pl.pallas_call(
        _stats_kernel,
        out_shape=(jax.ShapeDtypeStruct((NC, 1), jnp.float32),
                   jax.ShapeDtypeStruct((NC, 1), jnp.float32)),
        grid_spec=pltpu.PrefetchScalarGridSpec(
            num_scalar_prefetch=0,
            grid=grid,
            in_specs=[pl.BlockSpec((rt, HW), lambda i: (i, 0))],
            out_specs=(pl.BlockSpec((rt, 1), lambda i: (i, 0)),
                       pl.BlockSpec((rt, 1), lambda i: (i, 0))),
        ),
        compiler_params=cparams,
    )(x2d)

    # ---- Tiny (C,)-sized finalize: fold BN into per-channel scale/shift ----
    count = jnp.float32(N * H * W)
    ch_sum = row_sum.reshape(N, C).sum(axis=0)
    ch_sumsq = row_sumsq.reshape(N, C).sum(axis=0)
    mean = ch_sum / count
    var = ch_sumsq / count - mean * mean               # biased var (PyTorch BN norm)
    inv_std = jax.lax.rsqrt(var + eps)                 # once per channel
    scale = gamma.astype(jnp.float32) * inv_std        # (C,)
    shift = beta.astype(jnp.float32) - mean * scale    # (C,)
    row_scale = jnp.tile(scale, N).reshape(NC, 1)      # rows are n-major, c-minor
    row_shift = jnp.tile(shift, N).reshape(NC, 1)

    # ---- Pass 2: y = x*scale + shift, ReLU (tiled, pipelined, lane-dense) ----
    out2d = pl.pallas_call(
        _norm_relu_kernel,
        out_shape=jax.ShapeDtypeStruct((NC, HW), x2d.dtype),
        grid_spec=pltpu.PrefetchScalarGridSpec(
            num_scalar_prefetch=0,
            grid=grid,
            in_specs=[pl.BlockSpec((rt, HW), lambda i: (i, 0)),
                      pl.BlockSpec((rt, 1), lambda i: (i, 0)),
                      pl.BlockSpec((rt, 1), lambda i: (i, 0))],
            out_specs=pl.BlockSpec((rt, HW), lambda i: (i, 0)),
        ),
        compiler_params=cparams,
    )(x2d, row_scale, row_shift)

    return out2d.reshape(N, C, H, W)


if __name__ == "__main__":
    key = jax.random.PRNGKey(0)
    kx, kg, kb = jax.random.split(key, 3)

    N, C, H, W = 2, 4, 16, 16
    x = jax.random.normal(kx, (N, C, H, W), dtype=jnp.float32)
    # Non-trivial affine parameters to exercise the folded scale/shift path.
    gamma = 1.0 + 0.5 * jax.random.normal(kg, (C,), dtype=jnp.float32)
    beta = 0.1 * jax.random.normal(kb, (C,), dtype=jnp.float32)

    out = batchnorm_relu(x, gamma, beta)
    jax.block_until_ready(out)

    # Reference: pure-JAX training-mode BN (biased variance) + ReLU.
    mean = jnp.mean(x, axis=(0, 2, 3), keepdims=True)
    var = jnp.mean((x - mean) ** 2, axis=(0, 2, 3), keepdims=True)
    ref = jnp.maximum(
        (x - mean) * jax.lax.rsqrt(var + EPS)
        * gamma.reshape(1, C, 1, 1) + beta.reshape(1, C, 1, 1),
        0.0,
    )

    assert out.shape == (N, C, H, W)
    assert jnp.max(jnp.abs(out - ref)) < 1e-4

    print("KERNEL_OK")
</pallas_src>

<mosaic_0001>
module attributes {stable_mosaic.version = 11 : i64} {
  func.func @_stats_kernel(%arg0: i32, %arg1: memref<8x256xf32, #tpu.memory_space<vmem>>, %arg2: memref<8x1xf32, #tpu.memory_space<vmem>>, %arg3: memref<8x1xf32, #tpu.memory_space<vmem>>) attributes {dimension_semantics = [#tpu.dimension_semantics<parallel>], iteration_bounds = array<i64: 1>, scalar_prefetch = 0 : i64, scratch_operands = 0 : i64, tpu.core_type = #tpu.core_type<tc>, window_params = [{transform_indices = @transform_0, window_bounds = array<i64: 8, 256>}, {transform_indices = @transform_1, window_bounds = array<i64: 8, 1>}, {transform_indices = @transform_2, window_bounds = array<i64: 8, 1>}]} {
    %c0 = arith.constant 0 : index
    %c0_0 = arith.constant 0 : index
    %0 = vector.load %arg1[%c0, %c0_0] : memref<8x256xf32, #tpu.memory_space<vmem>>, vector<8x256xf32>
    %cst = arith.constant dense<0.000000e+00> : vector<8xf32>
    %1 = vector.multi_reduction <add>, %0, %cst [1] : vector<8x256xf32> to vector<8xf32>
    %2 = vector.shape_cast %1 : vector<8xf32> to vector<8x1xf32>
    %c0_1 = arith.constant 0 : index
    %c0_2 = arith.constant 0 : index
    %3 = vector.load %arg2[%c0_1, %c0_2] : memref<8x1xf32, #tpu.memory_space<vmem>>, vector<8x1xf32>
    tpu.vector_store %arg2[%c0_1, %c0_2], %2 {strides = array<i32>} : memref<8x1xf32, #tpu.memory_space<vmem>>, vector<8x1xf32>,
    %4 = arith.mulf %0, %0 : vector<8x256xf32>
    %cst_3 = arith.constant dense<0.000000e+00> : vector<8xf32>
    %5 = vector.multi_reduction <add>, %4, %cst_3 [1] : vector<8x256xf32> to vector<8xf32>
    %6 = vector.shape_cast %5 : vector<8xf32> to vector<8x1xf32>
    %c0_4 = arith.constant 0 : index
    %c0_5 = arith.constant 0 : index
    %7 = vector.load %arg3[%c0_4, %c0_5] : memref<8x1xf32, #tpu.memory_space<vmem>>, vector<8x1xf32>
    tpu.vector_store %arg3[%c0_4, %c0_5], %6 {strides = array<i32>} : memref<8x1xf32, #tpu.memory_space<vmem>>, vector<8x1xf32>,
    return
  }
  func.func @transform_0(%arg0: i32) -> (i32, i32) {
    %c0_i32 = arith.constant 0 : i32
    %c0_i32_0 = arith.constant 0 : i32
    return %arg0, %c0_i32 : i32, i32
  }
  func.func @transform_1(%arg0: i32) -> (i32, i32) {
    %c0_i32 = arith.constant 0 : i32
    %c0_i32_0 = arith.constant 0 : i32
    return %arg0, %c0_i32 : i32, i32
  }
  func.func @transform_2(%arg0: i32) -> (i32, i32) {
    %c0_i32 = arith.constant 0 : i32
    %c0_i32_0 = arith.constant 0 : i32
    return %arg0, %c0_i32 : i32, i32
  }
}

</mosaic_0001>

<llo_original>
// kernel: tpu_custom_call.1
$region0: #{tpu_custom_call.1}
  #allocation0 [shape = 'u32[]', space=smem, size = 0x4, offset = 0x4, fixed_abs, tag = 'smem constant byte address 0x4 - core index']
  #allocation1 [shape = 'u32[144,128]{1,0:T(1,128)}', space=vmem, size = 0x12000, scoped, tag = 'internal scratch']
  %s0 = inlined_call_operand.hbm [shape: f32[8,256], index: 0, kind: input, shape index: {}]
  %s1 = inlined_call_operand.vmem [shape: f32[8,1], index: 1, kind: output, shape index: {0}]
  %s2 = inlined_call_operand.vmem [shape: f32[8,1], index: 2, kind: output, shape index: {1}]
  %3 = xla_tuple %s1, %s2
  %s4 = sld [smem:[#allocation0]]
  $region26: #{tpu_custom_call.1} parent=0
    _
  %s6 = ssub.s32 1, %s4
  %s7 = scalar_select 0, %s6, %s4
  $region1: #{tpu_custom_call.1} parent=0
    #allocation2 [shape = 'u8[8192]{0}', space=vmem, size = 0x2000, scoped, tag = 'input window, operand 0, single buffered']
    #allocation3 [shape = 's32[1]{0}', space=sflag, size = 0x4, scoped, tag = 'scoped memory for tpu_custom_call.1']
    %8 = vsyncpa [#allocation3], 0
    // Predicated region
    $region2: #{tpu_custom_call.1} parent=1 // pred_check
      _
    $region3: #{tpu_custom_call.1} parent=1 // pred_check_branch
      %10 = sbr.rel (0) target = $region5
    $region4: #{tpu_custom_call.1} parent=1 // pred_region
      %s12 = ssub.s32 256, 256
      %13 = vsyncadd [#allocation3], %s12
      %s15 = sshll.u32 [#allocation2], 4
      %s16 = int_to_ptr.vmem [resolvable:$true] %s15
      %18 = dma.hbm_to_vmem [thread:$0]  %s0, 256, %s16, [#allocation3]
    $region5: #{tpu_custom_call.1} parent=1 // pred_fallthru
      _
    // Predicated region
    $region6: #{tpu_custom_call.1} parent=1 // pred_check
      _
    $region7: #{tpu_custom_call.1} parent=1 // pred_check_branch
      %20 = sbr.rel (0) target = $region9
    $region8: #{tpu_custom_call.1} parent=1 // pred_region
      %21 = dma.done [#allocation3], 256
    $region9: #{tpu_custom_call.1} parent=1 // pred_fallthru
      _
    %v22 = vld [vmem:[#allocation2] sm:$0xff]
    %v23 = vld [vmem:[#allocation2 + $0x8] sm:$0xff]
    %v24 = vadd.f32 %v22, %v23
    %25 = vadd.xlane.f32.xlu0 %v24
    %v26 = vpop.xlane.xlu0 %25
    %vm27 = vcmask 7168
    %28 = vst.msk [vmem:[%s1] sm:$0xff] %vm27, %v26
    %v29 = vmul.f32 %v22, %v22
    %v30 = vmul.f32 %v23, %v23
    %v31 = vadd.f32 %v29, %v30
    %32 = vadd.xlane.f32.xlu0 %v31
    %v33 = vpop.xlane.xlu0 %32
    %34 = vst.msk [vmem:[%s2] sm:$0xff] %vm27, %v33
    // Predicated region
    $region10: #{tpu_custom_call.1} parent=1 // pred_check
      _
    $region11: #{tpu_custom_call.1} parent=1 // pred_check_branch
      %36 = sbr.rel (0) target = $region13
    $region12: #{tpu_custom_call.1} parent=1 // pred_region
      _
    $region13: #{tpu_custom_call.1} parent=1 // pred_fallthru
      _
    // Predicated region
    $region14: #{tpu_custom_call.1} parent=1 // pred_check
      _
    $region15: #{tpu_custom_call.1} parent=1 // pred_check_branch
      %38 = sbr.rel (0) target = $region17
    $region16: #{tpu_custom_call.1} parent=1 // pred_region
      _
    $region17: #{tpu_custom_call.1} parent=1 // pred_fallthru
      _
    // Predicated region
    $region18: #{tpu_custom_call.1} parent=1 // pred_check
      _
    $region19: #{tpu_custom_call.1} parent=1 // pred_check_branch
      %40 = sbr.rel (0) target = $region21
    $region20: #{tpu_custom_call.1} parent=1 // pred_region
      _
    $region21: #{tpu_custom_call.1} parent=1 // pred_fallthru
      _
    // Predicated region
    $region22: #{tpu_custom_call.1} parent=1 // pred_check
      _
    $region23: #{tpu_custom_call.1} parent=1 // pred_check_branch
      %42 = sbr.rel (0) target = $region25
    $region24: #{tpu_custom_call.1} parent=1 // pred_region
      _
    $region25: #{tpu_custom_call.1} parent=1 // pred_fallthru
      _
    %43 = vsyncpa [#allocation3], 1

</llo_original>
